<compile_context>
chip_gen: v6e
topology: v6e:2x2x1
jax: 0.10.0
libtpu: 0.0.40
codegen_flags: <defaults>
</compile_context>

<pallas_src>
import numpy as np
import jax
import jax.numpy as jnp
from jax import lax
from jax.experimental import pallas as pl
from jax.experimental.pallas import tpu as pltpu


def _largest_divisor(n, target, step):
    """Largest multiple-of-`step` divisor of n that is <= target; else n itself."""
    if n <= target:
        return n
    t = (target // step) * step
    while t >= step:
        if n % t == 0:
            return t
        t -= step
    return n


def make_supcon_loss(alpha: float, temp: float, block_rows=None, block_cols=None,
                     compute_dtype=jnp.bfloat16):
    """Returns a jitted function (cls_feats, predicts, targets) -> scalar loss."""
    inv_temp = 1.0 / float(temp)
    inv_temp2 = 1.0 / 0.05          # hard-coded second temperature in nt_xent_loss2

    def kernel(frow_ref, fcolT_ref, preds_ref, lcol_ref, lrow_ref, msum_ref,
               out_ref, m1_s, l1_s, a1_s, m2_s, l2_s):
        i = pl.program_id(0)        # row-block index ("parallel")
        k = pl.program_id(1)        # col-block index (reduction, "arbitrary")
        nk = pl.num_programs(1)

        @pl.when(k == 0)
        def _init():
            m1_s[...] = jnp.full(m1_s.shape, -jnp.inf, jnp.float32)
            m2_s[...] = jnp.full(m2_s.shape, -jnp.inf, jnp.float32)
            l1_s[...] = jnp.zeros(l1_s.shape, jnp.float32)
            l2_s[...] = jnp.zeros(l2_s.shape, jnp.float32)
            a1_s[...] = jnp.zeros(a1_s.shape, jnp.float32)

        # (TR, TC) similarity tile on the MXU: bf16 x bf16 -> f32 accumulate.
        sim = jnp.dot(frow_ref[...], fcolT_ref[...],
                      preferred_element_type=jnp.float32)
        tr, tc = sim.shape

        lcol = lcol_ref[...]                                   # (TR, 1) int32
        lrow = lrow_ref[...]                                   # (1, TC) int32
        eq = lcol == lrow
        eq_f = eq.astype(jnp.float32)

        # ---- nt_xent_loss2 logits: same-label (incl. diagonal) entries zeroed.
        # Independent of the diagonal correction -> accumulated unconditionally.
        dpm = jnp.where(eq, 0.0, sim * inv_temp2)
        blk_max2 = jnp.max(dpm, axis=1, keepdims=True)
        new_m2 = jnp.maximum(m2_s[...], blk_max2)
        l2_s[...] = (l2_s[...] * jnp.exp(m2_s[...] - new_m2)
                     + jnp.sum(jnp.exp(dpm - new_m2), axis=1, keepdims=True))
        m2_s[...] = new_m2

        # ---- nt_xent_loss pieces (online logsumexp across col blocks) ----
        def accumulate_nt1(adt, mask_f):
            blk_max = jnp.max(adt, axis=1, keepdims=True)
            new_m = jnp.maximum(m1_s[...], blk_max)
            l1_s[...] = (l1_s[...] * jnp.exp(m1_s[...] - new_m)
                         + jnp.sum(jnp.exp(adt - new_m), axis=1, keepdims=True))
            m1_s[...] = new_m
            a1_s[...] += jnp.sum(mask_f * adt, axis=1, keepdims=True)

        # Diagonal correction is only needed when this tile intersects the
        # global diagonal; skip the iotas/selects on all other tiles.
        row_lo = i * tr
        col_lo = k * tc
        overlap = jnp.logical_and(row_lo < col_lo + tc, col_lo < row_lo + tr)

        @pl.when(overlap)
        def _diag_tile():
            g_row = row_lo + lax.broadcasted_iota(jnp.int32, (tr, tc), 0)
            g_col = col_lo + lax.broadcasted_iota(jnp.int32, (tr, tc), 1)
            diag = g_row == g_col
            adt = jnp.where(diag, 0.0, sim * inv_temp)
            mask_f = jnp.where(diag, 0.0, eq_f)   # positives: same label, not self
            accumulate_nt1(adt, mask_f)

        @pl.when(jnp.logical_not(overlap))
        def _plain_tile():
            accumulate_nt1(sim * inv_temp, eq_f)

        # ---- finalize this row block on the last col block ----
        @pl.when(k == nk - 1)
        def _finalize():
            msum = msum_ref[...]                    # (TR, 1) f32 = count(label) - 1
            msum_c = jnp.where(msum == 0.0, 1.0, msum)
            # sum_j mask*adt - msum*(max + log(sum_exp + eps)), divided by mask_sum
            pos = (a1_s[...] - msum * (m1_s[...] + jnp.log(l1_s[...] + 1e-12))) / msum_c
            pos_sum = jnp.sum(pos)

            # cross-entropy contribution of this row block
            preds = preds_ref[...].astype(jnp.float32)          # (TR, C)
            shifted = preds - jnp.max(preds, axis=-1, keepdims=True)
            lse = jnp.log(jnp.sum(jnp.exp(shifted), axis=-1, keepdims=True))
            cls_ids = lax.broadcasted_iota(jnp.int32, preds.shape, 1)
            one_hot = (lcol == cls_ids).astype(jnp.float32)
            ce_sum = -jnp.sum(one_hot * (shifted - lse))

            s_sum = jnp.sum(l2_s[...])                          # partial S

            lane = lax.broadcasted_iota(jnp.int32, out_ref.shape, 1)
            out_ref[...] = (jnp.where(lane == 0, pos_sum, 0.0)
                            + jnp.where(lane == 1, ce_sum, 0.0)
                            + jnp.where(lane == 2, s_sum, 0.0))

    def loss_fn(cls_feats, predicts, targets):
        B, D = cls_feats.shape
        C = predicts.shape[-1]

        # Row blocks: multiple-of-8 divisor of B, target 256 (MXU M-dim, HBM
        # re-streaming of the col features scales as B^2*D/tr).  If that leaves
        # a single row block, halve it so v7x can still split across its 2 TCs.
        tr = block_rows if block_rows is not None else _largest_divisor(B, 256, 8)
        if block_rows is None and B // tr < 2:
            alt = _largest_divisor(B, max(8, tr // 2), 8)
            if alt < B:
                tr = alt
        # Col blocks: multiple-of-128 divisor of B (lane legality of (1, TC)).
        tc = block_cols if block_cols is not None else _largest_divisor(B, 512, 128)
        assert B % tr == 0 and B % tc == 0, "block sizes must divide the batch"
        assert tr == B or tr % 8 == 0
        assert tc == B or tc % 128 == 0
        # TODO(synk): pad + sentinel-label masking for batches not divisible by the
        # block sizes (padded rows must be excluded from every mean/sum).
        n_row, n_col = B // tr, B // tc

        # ---- hoisted O(B*D) L2 normalization (f32 math), emitted in MXU dtype ----
        xf = cls_feats.astype(jnp.float32)
        nrm = jnp.sqrt(jnp.sum(xf * xf, axis=-1, keepdims=True))
        feats_n = (xf / jnp.maximum(nrm, 1e-12)).astype(compute_dtype)   # (B, D)
        feats_nT = feats_n.T                                             # (D, B)

        labels_col = targets.reshape(B, 1).astype(jnp.int32)
        labels_row = targets.reshape(1, B).astype(jnp.int32)

        # ---- hoisted O(B*C) label statistics (targets are CE class ids in [0,C)) ----
        one_hot_t = jax.nn.one_hot(targets, C, dtype=jnp.float32)        # (B, C)
        class_counts = jnp.sum(one_hot_t, axis=0)                        # (C,)
        counts = one_hot_t @ class_counts                                # (B,)
        msum = (counts - 1.0).reshape(B, 1)          # positives per row (excl. self)
        nneg = jnp.float32(B) - counts                # negatives per row
        ns_tot = jnp.sum(nneg)                        # global NS
        pos_rows = jnp.sum((msum[:, 0] > 0.0).astype(jnp.float32))

        grid_spec = pltpu.PrefetchScalarGridSpec(
            num_scalar_prefetch=0,
            grid=(n_row, n_col),
            in_specs=[
                pl.BlockSpec((tr, D), lambda i, k: (i, 0)),   # row features (bf16)
                pl.BlockSpec((D, tc), lambda i, k: (0, k)),   # col features^T (bf16)
                pl.BlockSpec((tr, C), lambda i, k: (i, 0)),   # logits
                pl.BlockSpec((tr, 1), lambda i, k: (i, 0)),   # row labels
                pl.BlockSpec((1, tc), lambda i, k: (0, k)),   # col labels
                pl.BlockSpec((tr, 1), lambda i, k: (i, 0)),   # per-row mask_sum
            ],
            out_specs=pl.BlockSpec((1, 128), lambda i, k: (0, i)),
            scratch_shapes=[pltpu.VMEM((tr, 1), jnp.float32) for _ in range(5)],
        )

        parts = pl.pallas_call(
            kernel,
            out_shape=jax.ShapeDtypeStruct((1, n_row * 128), jnp.float32),
            grid_spec=grid_spec,
            compiler_params=pltpu.CompilerParams(
                dimension_semantics=("parallel", "arbitrary"),
                # Fits comfortably under v7x's 64 MiB physical VMEM; plenty of
                # headroom on v5e/v6e (128 MiB).
                vmem_limit_bytes=48 * 1024 * 1024,
            ),
        )(feats_n, feats_nT, predicts, labels_col, labels_row, msum)

        # Tiny scalar epilogue: combine per-row-block partials.
        parts = parts.reshape(n_row, 128)
        pos_sum = jnp.sum(parts[:, 0])
        ce_sum = jnp.sum(parts[:, 1])
        s_tot = jnp.sum(parts[:, 2])

        bf = jnp.float32(B)
        ce_loss = ce_sum / bf
        cl_loss = -pos_sum / bf
        # nt_xent_loss2: x/NS applied only if any negatives exist anywhere.
        x_div = jnp.where(ns_tot > 0.0,
                          s_tot / jnp.where(ns_tot > 0.0, ns_tot, 1.0), 0.0)
        log_prob2 = -jnp.log(x_div + 1e-12)        # per-row constant
        triple_loss = -(pos_rows / bf) * log_prob2

        return ((1.0 - alpha) * ce_loss
                + alpha * cl_loss
                + 0.5 * alpha * triple_loss)

    return jax.jit(loss_fn)


def reference_loss(cls_feats, predicts, targets, alpha, temp):
    """Numpy (float64) transcription of the original PyTorch module."""
    x = np.asarray(cls_feats, dtype=np.float64)
    p = np.asarray(predicts, dtype=np.float64)
    t = np.asarray(targets)
    B = x.shape[0]
    n = x / np.maximum(np.linalg.norm(x, axis=-1, keepdims=True), 1e-12)

    # CrossEntropyLoss
    sm = p - p.max(axis=-1, keepdims=True)
    logsm = sm - np.log(np.exp(sm).sum(-1, keepdims=True))
    ce = -np.mean(logsm[np.arange(B), t])

    # nt_xent_loss
    labels = t[:, None]
    mask_b = labels == labels.T
    mask = (mask_b ^ np.diag(np.diag(mask_b))).astype(np.float64)
    adt = n @ n.T / temp
    adt = adt - np.diag(np.diag(adt))
    logits = adt - adt.max(1, keepdims=True)
    exp_logits = np.exp(logits)
    logits_m = logits * mask
    log_prob = logits_m - np.log(exp_logits.sum(1, keepdims=True) + 1e-12)
    mask_sum = mask.sum(1)
    mask_sum = np.where(mask_sum == 0, 1.0, mask_sum)
    pos = (mask * log_prob).sum(1) / mask_sum
    cl = -pos.mean()

    # nt_xent_loss2: for any non-skipped row the union of same-label and
    # different-label indices is all B samples, so the loop body computes the
    # same scalars; hoist them and keep the per-row skip semantics.
    mask2 = labels != labels.T
    dl = mask2.astype(np.float64)
    dpm = (n @ n.T / 0.05) * dl
    maxdot = dpm.max(1, keepdims=True)
    S = np.exp(dpm - maxdot).sum()
    NS = dl.sum()
    ndns = np.zeros(B)
    nsum = np.zeros(B)
    for i in range(B):
        if mask2[i].sum() == 0:
            continue
        ndns[i] = S
        nsum[i] = NS
    xv = np.repeat(ndns[:, None], B, axis=1)
    ns = np.repeat(nsum[:, None], B, axis=1)
    if not np.all(ns == 0):
        xv = xv / ns
    log_prob2 = -np.log(xv + 1e-12)
    pos2 = (mask * log_prob2).sum(1) / mask_sum
    triple = -pos2.mean()

    return (1 - alpha) * ce + alpha * cl + 0.5 * alpha * triple


if __name__ == "__main__":
    alpha, temp = 0.5, 0.1
    k1, k2, k3, k4, k5, k6 = jax.random.split(jax.random.PRNGKey(0), 6)

    # Case 1: small shape, single-tile grid, f32 compute dtype -> tight tolerance
    # (validates the kernel math independently of bf16 quantization).
    B, D, C = 8, 32, 4
    feats = jax.random.normal(k1, (B, D), dtype=jnp.float32)
    preds = jax.random.normal(k2, (B, C), dtype=jnp.float32)
    tgts = jax.random.randint(k3, (B,), 0, C, dtype=jnp.int32)
    loss_f32 = jax.block_until_ready(
        make_supcon_loss(alpha, temp, compute_dtype=jnp.float32)(feats, preds, tgts))
    ref_small = reference_loss(feats, preds, tgts, alpha, temp)
    np.testing.assert_allclose(np.asarray(loss_f32), ref_small, rtol=1e-3, atol=1e-3)

    # Case 2: batch large enough to exercise the tiled grid (4 row x 2 col blocks)
    # and the online-logsumexp reduction, default bf16 MXU path -> bf16 tolerance.
    B2, D2, C2 = 256, 64, 4
    feats2 = jax.random.normal(k4, (B2, D2), dtype=jnp.float32)
    preds2 = jax.random.normal(k5, (B2, C2), dtype=jnp.float32)
    tgts2 = jax.random.randint(k6, (B2,), 0, C2, dtype=jnp.int32)
    loss_fn_tiled = make_supcon_loss(alpha, temp, block_rows=64, block_cols=128)
    loss_big = jax.block_until_ready(loss_fn_tiled(feats2, preds2, tgts2))
    ref_big = reference_loss(feats2, preds2, tgts2, alpha, temp)
    np.testing.assert_allclose(np.asarray(loss_big), ref_big, rtol=3e-2, atol=3e-2)

    # Case 3: same data, automatic tile selection (tr halved to keep n_row >= 2).
    loss_auto = jax.block_until_ready(
        make_supcon_loss(alpha, temp)(feats2, preds2, tgts2))
    np.testing.assert_allclose(np.asarray(loss_auto), ref_big, rtol=3e-2, atol=3e-2)

    print("KERNEL_OK")
</pallas_src>

<mosaic_0001>
module attributes {stable_mosaic.version = 11 : i64} {
  func.func @kernel(%arg0: i32, %arg1: i32, %arg2: memref<8x32xf32, #tpu.memory_space<vmem>>, %arg3: memref<32x8xf32, #tpu.memory_space<vmem>>, %arg4: memref<8x4xf32, #tpu.memory_space<vmem>>, %arg5: memref<8x1xi32, #tpu.memory_space<vmem>>, %arg6: memref<1x8xi32, #tpu.memory_space<vmem>>, %arg7: memref<8x1xf32, #tpu.memory_space<vmem>>, %arg8: memref<1x128xf32, #tpu.memory_space<vmem>>, %arg9: memref<8x1xf32, #tpu.memory_space<vmem>>, %arg10: memref<8x1xf32, #tpu.memory_space<vmem>>, %arg11: memref<8x1xf32, #tpu.memory_space<vmem>>, %arg12: memref<8x1xf32, #tpu.memory_space<vmem>>, %arg13: memref<8x1xf32, #tpu.memory_space<vmem>>) attributes {dimension_semantics = [#tpu.dimension_semantics<parallel>, #tpu.dimension_semantics<arbitrary>], iteration_bounds = array<i64: 1, 1>, scalar_prefetch = 0 : i64, scratch_operands = 5 : i64, tpu.core_type = #tpu.core_type<tc>, window_params = [{transform_indices = @transform_0, window_bounds = array<i64: 8, 32>}, {transform_indices = @transform_1, window_bounds = array<i64: 32, 8>}, {transform_indices = @transform_2, window_bounds = array<i64: 8, 4>}, {transform_indices = @transform_3, window_bounds = array<i64: 8, 1>}, {transform_indices = @transform_4, window_bounds = array<i64: 1, 8>}, {transform_indices = @transform_5, window_bounds = array<i64: 8, 1>}, {transform_indices = @transform_6, window_bounds = array<i64: 1, 128>}]} {
    %c0_i32 = arith.constant 0 : i32
    %0 = arith.cmpi eq, %arg1, %c0_i32 : i32
    %1 = arith.extui %0 : i1 to i32
    %c0_i32_0 = arith.constant 0 : i32
    %2 = arith.cmpi ne, %1, %c0_i32_0 : i32
    scf.if %2 {
      %cst_29 = arith.constant 0xFF800000 : f32
      %49 = vector.broadcast %cst_29 : f32 to vector<8x1xf32>
      %c0_30 = arith.constant 0 : index
      %c0_31 = arith.constant 0 : index
      %50 = vector.load %arg9[%c0_30, %c0_31] : memref<8x1xf32, #tpu.memory_space<vmem>>, vector<8x1xf32>
      tpu.vector_store %arg9[%c0_30, %c0_31], %49 {strides = array<i32>} : memref<8x1xf32, #tpu.memory_space<vmem>>, vector<8x1xf32>,
      %cst_32 = arith.constant 0xFF800000 : f32
      %51 = vector.broadcast %cst_32 : f32 to vector<8x1xf32>
      %c0_33 = arith.constant 0 : index
      %c0_34 = arith.constant 0 : index
      %52 = vector.load %arg12[%c0_33, %c0_34] : memref<8x1xf32, #tpu.memory_space<vmem>>, vector<8x1xf32>
      tpu.vector_store %arg12[%c0_33, %c0_34], %51 {strides = array<i32>} : memref<8x1xf32, #tpu.memory_space<vmem>>, vector<8x1xf32>,
      %cst_35 = arith.constant 0.000000e+00 : f32
      %53 = vector.broadcast %cst_35 : f32 to vector<8x1xf32>
      %c0_36 = arith.constant 0 : index
      %c0_37 = arith.constant 0 : index
      %54 = vector.load %arg10[%c0_36, %c0_37] : memref<8x1xf32, #tpu.memory_space<vmem>>, vector<8x1xf32>
      tpu.vector_store %arg10[%c0_36, %c0_37], %53 {strides = array<i32>} : memref<8x1xf32, #tpu.memory_space<vmem>>, vector<8x1xf32>,
      %cst_38 = arith.constant 0.000000e+00 : f32
      %55 = vector.broadcast %cst_38 : f32 to vector<8x1xf32>
      %c0_39 = arith.constant 0 : index
      %c0_40 = arith.constant 0 : index
      %56 = vector.load %arg13[%c0_39, %c0_40] : memref<8x1xf32, #tpu.memory_space<vmem>>, vector<8x1xf32>
      tpu.vector_store %arg13[%c0_39, %c0_40], %55 {strides = array<i32>} : memref<8x1xf32, #tpu.memory_space<vmem>>, vector<8x1xf32>,
      %cst_41 = arith.constant 0.000000e+00 : f32
      %57 = vector.broadcast %cst_41 : f32 to vector<8x1xf32>
      %c0_42 = arith.constant 0 : index
      %c0_43 = arith.constant 0 : index
      %58 = vector.load %arg11[%c0_42, %c0_43] : memref<8x1xf32, #tpu.memory_space<vmem>>, vector<8x1xf32>
      tpu.vector_store %arg11[%c0_42, %c0_43], %57 {strides = array<i32>} : memref<8x1xf32, #tpu.memory_space<vmem>>, vector<8x1xf32>,
    } else {
    }
    %c0 = arith.constant 0 : index
    %c0_1 = arith.constant 0 : index
    %3 = vector.load %arg2[%c0, %c0_1] : memref<8x32xf32, #tpu.memory_space<vmem>>, vector<8x32xf32>
    %c0_2 = arith.constant 0 : index
    %c0_3 = arith.constant 0 : index
    %4 = vector.load %arg3[%c0_2, %c0_3] : memref<32x8xf32, #tpu.memory_space<vmem>>, vector<32x8xf32>
    %cst = arith.constant dense<0.000000e+00> : vector<8x8xf32>
    %5 = tpu.matmul %3, %4, %cst {dimension_numbers = #tpu.dot_dimension_numbers<[1], [0], [0], [1], [0, 0, 1, 1], [], []>} : vector<8x32xf32>, vector<32x8xf32>, vector<8x8xf32> -> vector<8x8xf32>
    %c0_4 = arith.constant 0 : index
    %c0_5 = arith.constant 0 : index
    %6 = vector.load %arg5[%c0_4, %c0_5] : memref<8x1xi32, #tpu.memory_space<vmem>>, vector<8x1xi32>
    %c0_6 = arith.constant 0 : index
    %c0_7 = arith.constant 0 : index
    %7 = vector.load %arg6[%c0_6, %c0_7] : memref<1x8xi32, #tpu.memory_space<vmem>>, vector<1x8xi32>
    %8 = vector.broadcast %6 : vector<8x1xi32> to vector<8x8xi32>
    %9 = vector.broadcast %7 : vector<1x8xi32> to vector<8x8xi32>
    %10 = arith.cmpi eq, %8, %9 : vector<8x8xi32>
    %11 = arith.extui %10 : vector<8x8xi1> to vector<8x8xi32>
    %12 = arith.sitofp %11 : vector<8x8xi32> to vector<8x8xf32>
    %cst_8 = arith.constant 2.000000e+01 : f32
    %13 = vector.broadcast %cst_8 : f32 to vector<8x8xf32>
    %14 = arith.mulf %5, %13 : vector<8x8xf32>
    %cst_9 = arith.constant 0.000000e+00 : f32
    %15 = vector.broadcast %cst_9 : f32 to vector<8x8xf32>
    %16 = arith.select %10, %15, %14 : vector<8x8xi1>, vector<8x8xf32>
    %cst_10 = arith.constant dense<0xFF800000> : vector<8xf32>
    %17 = vector.multi_reduction <maximumf>, %16, %cst_10 [1] : vector<8x8xf32> to vector<8xf32>
    %18 = vector.shape_cast %17 : vector<8xf32> to vector<8x1xf32>
    %c0_11 = arith.constant 0 : index
    %c0_12 = arith.constant 0 : index
    %19 = vector.load %arg12[%c0_11, %c0_12] : memref<8x1xf32, #tpu.memory_space<vmem>>, vector<8x1xf32>
    %20 = arith.maximumf %19, %18 : vector<8x1xf32>
    %c0_13 = arith.constant 0 : index
    %c0_14 = arith.constant 0 : index
    %21 = vector.load %arg13[%c0_13, %c0_14] : memref<8x1xf32, #tpu.memory_space<vmem>>, vector<8x1xf32>
    %c0_15 = arith.constant 0 : index
    %c0_16 = arith.constant 0 : index
    %22 = vector.load %arg12[%c0_15, %c0_16] : memref<8x1xf32, #tpu.memory_space<vmem>>, vector<8x1xf32>
    %23 = arith.subf %22, %20 : vector<8x1xf32>
    %24 = math.exp %23 : vector<8x1xf32>
    %25 = arith.mulf %21, %24 : vector<8x1xf32>
    %26 = vector.broadcast %20 : vector<8x1xf32> to vector<8x8xf32>
    %27 = arith.subf %16, %26 : vector<8x8xf32>
    %28 = math.exp %27 : vector<8x8xf32>
    %cst_17 = arith.constant dense<0.000000e+00> : vector<8xf32>
    %29 = vector.multi_reduction <add>, %28, %cst_17 [1] : vector<8x8xf32> to vector<8xf32>
    %30 = vector.shape_cast %29 : vector<8xf32> to vector<8x1xf32>
    %31 = arith.addf %25, %30 : vector<8x1xf32>
    %c0_18 = arith.constant 0 : index
    %c0_19 = arith.constant 0 : index
    %32 = vector.load %arg13[%c0_18, %c0_19] : memref<8x1xf32, #tpu.memory_space<vmem>>, vector<8x1xf32>
    tpu.vector_store %arg13[%c0_18, %c0_19], %31 {strides = array<i32>} : memref<8x1xf32, #tpu.memory_space<vmem>>, vector<8x1xf32>,
    %c0_20 = arith.constant 0 : index
    %c0_21 = arith.constant 0 : index
    %33 = vector.load %arg12[%c0_20, %c0_21] : memref<8x1xf32, #tpu.memory_space<vmem>>, vector<8x1xf32>
    tpu.vector_store %arg12[%c0_20, %c0_21], %20 {strides = array<i32>} : memref<8x1xf32, #tpu.memory_space<vmem>>, vector<8x1xf32>,
    %c8_i32 = arith.constant 8 : i32
    %34 = arith.muli %arg0, %c8_i32 : i32
    %c8_i32_22 = arith.constant 8 : i32
    %35 = arith.muli %arg1, %c8_i32_22 : i32
    %c8_i32_23 = arith.constant 8 : i32
    %36 = arith.addi %35, %c8_i32_23 : i32
    %37 = arith.cmpi slt, %34, %36 : i32
    %c8_i32_24 = arith.constant 8 : i32
    %38 = arith.addi %34, %c8_i32_24 : i32
    %39 = arith.cmpi slt, %35, %38 : i32
    %40 = arith.andi %37, %39 : i1
    %41 = arith.extui %40 : i1 to i32
    %c0_i32_25 = arith.constant 0 : i32
    %42 = arith.cmpi ne, %41, %c0_i32_25 : i32
    scf.if %42 {
      %49 = tpu.iota {dimensions = array<i32: 0>} : vector<8x8xi32>
      %50 = vector.broadcast %34 : i32 to vector<8x8xi32>
      %51 = arith.addi %50, %49 : vector<8x8xi32>
      %52 = tpu.iota {dimensions = array<i32: 1>} : vector<8x8xi32>
      %53 = vector.broadcast %35 : i32 to vector<8x8xi32>
      %54 = arith.addi %53, %52 : vector<8x8xi32>
      %55 = arith.cmpi eq, %51, %54 : vector<8x8xi32>
      %cst_29 = arith.constant 1.000000e+01 : f32
      %56 = vector.broadcast %cst_29 : f32 to vector<8x8xf32>
      %57 = arith.mulf %5, %56 : vector<8x8xf32>
      %cst_30 = arith.constant 0.000000e+00 : f32
      %58 = vector.broadcast %cst_30 : f32 to vector<8x8xf32>
      %59 = arith.select %55, %58, %57 : vector<8x8xi1>, vector<8x8xf32>
      %cst_31 = arith.constant 0.000000e+00 : f32
      %60 = vector.broadcast %cst_31 : f32 to vector<8x8xf32>
      %61 = arith.select %55, %60, %12 : vector<8x8xi1>, vector<8x8xf32>
      %cst_32 = arith.constant dense<0xFF800000> : vector<8xf32>
      %62 = vector.multi_reduction <maximumf>, %59, %cst_32 [1] : vector<8x8xf32> to vector<8xf32>
      %63 = vector.shape_cast %62 : vector<8xf32> to vector<8x1xf32>
      %c0_33 = arith.constant 0 : index
      %c0_34 = arith.constant 0 : index
      %64 = vector.load %arg9[%c0_33, %c0_34] : memref<8x1xf32, #tpu.memory_space<vmem>>, vector<8x1xf32>
      %65 = arith.maximumf %64, %63 : vector<8x1xf32>
      %c0_35 = arith.constant 0 : index
      %c0_36 = arith.constant 0 : index
      %66 = vector.load %arg10[%c0_35, %c0_36] : memref<8x1xf32, #tpu.memory_space<vmem>>, vector<8x1xf32>
      %c0_37 = arith.constant 0 : index
      %c0_38 = arith.constant 0 : index
      %67 = vector.load %arg9[%c0_37, %c0_38] : memref<8x1xf32, #tpu.memory_space<vmem>>, vector<8x1xf32>
      %68 = arith.subf %67, %65 : vector<8x1xf32>
      %69 = math.exp %68 : vector<8x1xf32>
      %70 = arith.mulf %66, %69 : vector<8x1xf32>
      %71 = vector.broadcast %65 : vector<8x1xf32> to vector<8x8xf32>
      %72 = arith.subf %59, %71 : vector<8x8xf32>
      %73 = math.exp %72 : vector<8x8xf32>
      %cst_39 = arith.constant dense<0.000000e+00> : vector<8xf32>
      %74 = vector.multi_reduction <add>, %73, %cst_39 [1] : vector<8x8xf32> to vector<8xf32>
      %75 = vector.shape_cast %74 : vector<8xf32> to vector<8x1xf32>
      %76 = arith.addf %70, %75 : vector<8x1xf32>
      %c0_40 = arith.constant 0 : index
      %c0_41 = arith.constant 0 : index
      %77 = vector.load %arg10[%c0_40, %c0_41] : memref<8x1xf32, #tpu.memory_space<vmem>>, vector<8x1xf32>
      tpu.vector_store %arg10[%c0_40, %c0_41], %76 {strides = array<i32>} : memref<8x1xf32, #tpu.memory_space<vmem>>, vector<8x1xf32>,
      %c0_42 = arith.constant 0 : index
      %c0_43 = arith.constant 0 : index
      %78 = vector.load %arg9[%c0_42, %c0_43] : memref<8x1xf32, #tpu.memory_space<vmem>>, vector<8x1xf32>
      tpu.vector_store %arg9[%c0_42, %c0_43], %65 {strides = array<i32>} : memref<8x1xf32, #tpu.memory_space<vmem>>, vector<8x1xf32>,
      %c0_44 = arith.constant 0 : index
      %c0_45 = arith.constant 0 : index
      %79 = vector.load %arg11[%c0_44, %c0_45] : memref<8x1xf32, #tpu.memory_space<vmem>>, vector<8x1xf32>
      %80 = arith.mulf %61, %59 : vector<8x8xf32>
      %cst_46 = arith.constant dense<0.000000e+00> : vector<8xf32>
      %81 = vector.multi_reduction <add>, %80, %cst_46 [1] : vector<8x8xf32> to vector<8xf32>
      %82 = vector.shape_cast %81 : vector<8xf32> to vector<8x1xf32>
      %83 = arith.addf %79, %82 : vector<8x1xf32>
      %c0_47 = arith.constant 0 : index
      %c0_48 = arith.constant 0 : index
      %84 = vector.load %arg11[%c0_47, %c0_48] : memref<8x1xf32, #tpu.memory_space<vmem>>, vector<8x1xf32>
      tpu.vector_store %arg11[%c0_47, %c0_48], %83 {strides = array<i32>} : memref<8x1xf32, #tpu.memory_space<vmem>>, vector<8x1xf32>,
    } else {
    }
    %true = arith.constant true
    %43 = arith.xori %40, %true : i1
    %44 = arith.extui %43 : i1 to i32
    %c0_i32_26 = arith.constant 0 : i32
    %45 = arith.cmpi ne, %44, %c0_i32_26 : i32
    scf.if %45 {
      %cst_29 = arith.constant 1.000000e+01 : f32
      %49 = vector.broadcast %cst_29 : f32 to vector<8x8xf32>
      %50 = arith.mulf %5, %49 : vector<8x8xf32>
      %cst_30 = arith.constant dense<0xFF800000> : vector<8xf32>
      %51 = vector.multi_reduction <maximumf>, %50, %cst_30 [1] : vector<8x8xf32> to vector<8xf32>
      %52 = vector.shape_cast %51 : vector<8xf32> to vector<8x1xf32>
      %c0_31 = arith.constant 0 : index
      %c0_32 = arith.constant 0 : index
      %53 = vector.load %arg9[%c0_31, %c0_32] : memref<8x1xf32, #tpu.memory_space<vmem>>, vector<8x1xf32>
      %54 = arith.maximumf %53, %52 : vector<8x1xf32>
      %c0_33 = arith.constant 0 : index
      %c0_34 = arith.constant 0 : index
      %55 = vector.load %arg10[%c0_33, %c0_34] : memref<8x1xf32, #tpu.memory_space<vmem>>, vector<8x1xf32>
      %c0_35 = arith.constant 0 : index
      %c0_36 = arith.constant 0 : index
      %56 = vector.load %arg9[%c0_35, %c0_36] : memref<8x1xf32, #tpu.memory_space<vmem>>, vector<8x1xf32>
      %57 = arith.subf %56, %54 : vector<8x1xf32>
      %58 = math.exp %57 : vector<8x1xf32>
      %59 = arith.mulf %55, %58 : vector<8x1xf32>
      %60 = vector.broadcast %54 : vector<8x1xf32> to vector<8x8xf32>
      %61 = arith.subf %50, %60 : vector<8x8xf32>
      %62 = math.exp %61 : vector<8x8xf32>
      %cst_37 = arith.constant dense<0.000000e+00> : vector<8xf32>
      %63 = vector.multi_reduction <add>, %62, %cst_37 [1] : vector<8x8xf32> to vector<8xf32>
      %64 = vector.shape_cast %63 : vector<8xf32> to vector<8x1xf32>
      %65 = arith.addf %59, %64 : vector<8x1xf32>
      %c0_38 = arith.constant 0 : index
      %c0_39 = arith.constant 0 : index
      %66 = vector.load %arg10[%c0_38, %c0_39] : memref<8x1xf32, #tpu.memory_space<vmem>>, vector<8x1xf32>
      tpu.vector_store %arg10[%c0_38, %c0_39], %65 {strides = array<i32>} : memref<8x1xf32, #tpu.memory_space<vmem>>, vector<8x1xf32>,
      %c0_40 = arith.constant 0 : index
      %c0_41 = arith.constant 0 : index
      %67 = vector.load %arg9[%c0_40, %c0_41] : memref<8x1xf32, #tpu.memory_space<vmem>>, vector<8x1xf32>
      tpu.vector_store %arg9[%c0_40, %c0_41], %54 {strides = array<i32>} : memref<8x1xf32, #tpu.memory_space<vmem>>, vector<8x1xf32>,
      %c0_42 = arith.constant 0 : index
      %c0_43 = arith.constant 0 : index
      %68 = vector.load %arg11[%c0_42, %c0_43] : memref<8x1xf32, #tpu.memory_space<vmem>>, vector<8x1xf32>
      %69 = arith.mulf %12, %50 : vector<8x8xf32>
      %cst_44 = arith.constant dense<0.000000e+00> : vector<8xf32>
      %70 = vector.multi_reduction <add>, %69, %cst_44 [1] : vector<8x8xf32> to vector<8xf32>
      %71 = vector.shape_cast %70 : vector<8xf32> to vector<8x1xf32>
      %72 = arith.addf %68, %71 : vector<8x1xf32>
      %c0_45 = arith.constant 0 : index
      %c0_46 = arith.constant 0 : index
      %73 = vector.load %arg11[%c0_45, %c0_46] : memref<8x1xf32, #tpu.memory_space<vmem>>, vector<8x1xf32>
      tpu.vector_store %arg11[%c0_45, %c0_46], %72 {strides = array<i32>} : memref<8x1xf32, #tpu.memory_space<vmem>>, vector<8x1xf32>,
    } else {
    }
    %c0_i32_27 = arith.constant 0 : i32
    %46 = arith.cmpi eq, %arg1, %c0_i32_27 : i32
    %47 = arith.extui %46 : i1 to i32
    %c0_i32_28 = arith.constant 0 : i32
    %48 = arith.cmpi ne, %47, %c0_i32_28 : i32
    scf.if %48 {
      %c0_29 = arith.constant 0 : index
      %c0_30 = arith.constant 0 : index
      %49 = vector.load %arg7[%c0_29, %c0_30] : memref<8x1xf32, #tpu.memory_space<vmem>>, vector<8x1xf32>
      %cst_31 = arith.constant 0.000000e+00 : f32
      %50 = vector.broadcast %cst_31 : f32 to vector<8x1xf32>
      %51 = arith.cmpf oeq, %49, %50 : vector<8x1xf32>
      %cst_32 = arith.constant 1.000000e+00 : f32
      %52 = vector.broadcast %cst_32 : f32 to vector<8x1xf32>
      %53 = arith.select %51, %52, %49 : vector<8x1xi1>, vector<8x1xf32>
      %c0_33 = arith.constant 0 : index
      %c0_34 = arith.constant 0 : index
      %54 = vector.load %arg11[%c0_33, %c0_34] : memref<8x1xf32, #tpu.memory_space<vmem>>, vector<8x1xf32>
      %c0_35 = arith.constant 0 : index
      %c0_36 = arith.constant 0 : index
      %55 = vector.load %arg9[%c0_35, %c0_36] : memref<8x1xf32, #tpu.memory_space<vmem>>, vector<8x1xf32>
      %c0_37 = arith.constant 0 : index
      %c0_38 = arith.constant 0 : index
      %56 = vector.load %arg10[%c0_37, %c0_38] : memref<8x1xf32, #tpu.memory_space<vmem>>, vector<8x1xf32>
      %cst_39 = arith.constant 9.99999996E-13 : f32
      %57 = vector.broadcast %cst_39 : f32 to vector<8x1xf32>
      %58 = arith.addf %56, %57 : vector<8x1xf32>
      %59 = math.log %58 : vector<8x1xf32>
      %60 = arith.addf %55, %59 : vector<8x1xf32>
      %61 = arith.mulf %49, %60 : vector<8x1xf32>
      %62 = arith.subf %54, %61 : vector<8x1xf32>
      %63 = arith.divf %62, %53 : vector<8x1xf32>
      %64 = vector.shape_cast %63 : vector<8x1xf32> to vector<1x8x1xf32>
      %cst_40 = arith.constant dense<0.000000e+00> : vector<1xf32>
      %65 = vector.multi_reduction <add>, %64, %cst_40 [1, 2] : vector<1x8x1xf32> to vector<1xf32>
      %66 = vector.shape_cast %65 : vector<1xf32> to vector<1x1x1xf32>
      %67 = vector.extract %66[0, 0, 0] : f32 from vector<1x1x1xf32>
      %c0_41 = arith.constant 0 : index
      %c0_42 = arith.constant 0 : index
      %68 = vector.load %arg4[%c0_41, %c0_42] : memref<8x4xf32, #tpu.memory_space<vmem>>, vector<8x4xf32>
      %cst_43 = arith.constant dense<0xFF800000> : vector<8xf32>
      %69 = vector.multi_reduction <maximumf>, %68, %cst_43 [1] : vector<8x4xf32> to vector<8xf32>
      %70 = vector.shape_cast %69 : vector<8xf32> to vector<8x1xf32>
      %71 = vector.broadcast %70 : vector<8x1xf32> to vector<8x4xf32>
      %72 = arith.subf %68, %71 : vector<8x4xf32>
      %73 = math.exp %72 : vector<8x4xf32>
      %cst_44 = arith.constant dense<0.000000e+00> : vector<8xf32>
      %74 = vector.multi_reduction <add>, %73, %cst_44 [1] : vector<8x4xf32> to vector<8xf32>
      %75 = vector.shape_cast %74 : vector<8xf32> to vector<8x1xf32>
      %76 = math.log %75 : vector<8x1xf32>
      %77 = tpu.iota {dimensions = array<i32: 1>} : vector<8x4xi32>
      %78 = vector.broadcast %6 : vector<8x1xi32> to vector<8x4xi32>
      %79 = arith.cmpi eq, %78, %77 : vector<8x4xi32>
      %80 = arith.extui %79 : vector<8x4xi1> to vector<8x4xi32>
      %81 = arith.sitofp %80 : vector<8x4xi32> to vector<8x4xf32>
      %82 = vector.broadcast %76 : vector<8x1xf32> to vector<8x4xf32>
      %83 = arith.subf %72, %82 : vector<8x4xf32>
      %84 = arith.mulf %81, %83 : vector<8x4xf32>
      %85 = vector.shape_cast %84 : vector<8x4xf32> to vector<1x8x4xf32>
      %cst_45 = arith.constant dense<0.000000e+00> : vector<1xf32>
      %86 = vector.multi_reduction <add>, %85, %cst_45 [1, 2] : vector<1x8x4xf32> to vector<1xf32>
      %87 = vector.shape_cast %86 : vector<1xf32> to vector<1x1x1xf32>
      %88 = vector.extract %87[0, 0, 0] : f32 from vector<1x1x1xf32>
      %cst_46 = arith.constant 0.000000e+00 : f32
      %89 = arith.subf %cst_46, %88 : f32
      %c0_47 = arith.constant 0 : index
      %c0_48 = arith.constant 0 : index
      %90 = vector.load %arg13[%c0_47, %c0_48] : memref<8x1xf32, #tpu.memory_space<vmem>>, vector<8x1xf32>
      %91 = vector.shape_cast %90 : vector<8x1xf32> to vector<1x8x1xf32>
      %cst_49 = arith.constant dense<0.000000e+00> : vector<1xf32>
      %92 = vector.multi_reduction <add>, %91, %cst_49 [1, 2] : vector<1x8x1xf32> to vector<1xf32>
      %93 = vector.shape_cast %92 : vector<1xf32> to vector<1x1x1xf32>
      %94 = vector.extract %93[0, 0, 0] : f32 from vector<1x1x1xf32>
      %95 = tpu.iota {dimensions = array<i32: 1>} : vector<1x128xi32>
      %c0_i32_50 = arith.constant 0 : i32
      %96 = vector.broadcast %c0_i32_50 : i32 to vector<1x128xi32>
      %97 = arith.cmpi eq, %95, %96 : vector<1x128xi32>
      %cst_51 = arith.constant 0.000000e+00 : f32
      %98 = vector.broadcast %67 : f32 to vector<1x128xf32>
      %99 = vector.broadcast %cst_51 : f32 to vector<1x128xf32>
      %100 = arith.select %97, %98, %99 : vector<1x128xi1>, vector<1x128xf32>
      %c1_i32 = arith.constant 1 : i32
      %101 = vector.broadcast %c1_i32 : i32 to vector<1x128xi32>
      %102 = arith.cmpi eq, %95, %101 : vector<1x128xi32>
      %cst_52 = arith.constant 0.000000e+00 : f32
      %103 = vector.broadcast %89 : f32 to vector<1x128xf32>
      %104 = vector.broadcast %cst_52 : f32 to vector<1x128xf32>
      %105 = arith.select %102, %103, %104 : vector<1x128xi1>, vector<1x128xf32>
      %106 = arith.addf %100, %105 : vector<1x128xf32>
      %c2_i32 = arith.constant 2 : i32
      %107 = vector.broadcast %c2_i32 : i32 to vector<1x128xi32>
      %108 = arith.cmpi eq, %95, %107 : vector<1x128xi32>
      %cst_53 = arith.constant 0.000000e+00 : f32
      %109 = vector.broadcast %94 : f32 to vector<1x128xf32>
      %110 = vector.broadcast %cst_53 : f32 to vector<1x128xf32>
      %111 = arith.select %108, %109, %110 : vector<1x128xi1>, vector<1x128xf32>
      %112 = arith.addf %106, %111 : vector<1x128xf32>
      %c0_54 = arith.constant 0 : index
      %c0_55 = arith.constant 0 : index
      %113 = vector.load %arg8[%c0_54, %c0_55] : memref<1x128xf32, #tpu.memory_space<vmem>>, vector<1x128xf32>
      tpu.vector_store %arg8[%c0_54, %c0_55], %112 {strides = array<i32>} : memref<1x128xf32, #tpu.memory_space<vmem>>, vector<1x128xf32>,
    } else {
    }
    return
  }
  func.func @transform_0(%arg0: i32, %arg1: i32) -> (i32, i32) {
    %c0_i32 = arith.constant 0 : i32
    %c0_i32_0 = arith.constant 0 : i32
    return %arg0, %c0_i32 : i32, i32
  }
  func.func @transform_1(%arg0: i32, %arg1: i32) -> (i32, i32) {
    %c0_i32 = arith.constant 0 : i32
    %c0_i32_0 = arith.constant 0 : i32
    return %c0_i32, %arg1 : i32, i32
  }
  func.func @transform_2(%arg0: i32, %arg1: i32) -> (i32, i32) {
    %c0_i32 = arith.constant 0 : i32
    %c0_i32_0 = arith.constant 0 : i32
    return %arg0, %c0_i32 : i32, i32
  }
  func.func @transform_3(%arg0: i32, %arg1: i32) -> (i32, i32) {
    %c0_i32 = arith.constant 0 : i32
    %c0_i32_0 = arith.constant 0 : i32
    return %arg0, %c0_i32 : i32, i32
  }
  func.func @transform_4(%arg0: i32, %arg1: i32) -> (i32, i32) {
    %c0_i32 = arith.constant 0 : i32
    %c0_i32_0 = arith.constant 0 : i32
    return %c0_i32, %arg1 : i32, i32
  }
  func.func @transform_5(%arg0: i32, %arg1: i32) -> (i32, i32) {
    %c0_i32 = arith.constant 0 : i32
    %c0_i32_0 = arith.constant 0 : i32
    return %arg0, %c0_i32 : i32, i32
  }
  func.func @transform_6(%arg0: i32, %arg1: i32) -> (i32, i32) {
    %c0_i32 = arith.constant 0 : i32
    %c0_i32_0 = arith.constant 0 : i32
    return %c0_i32, %arg0 : i32, i32
  }
}

</mosaic_0001>

<llo_original>
// kernel: loss_fn.1
$region0: #{loss_fn.1}
  #allocation0 [shape = 'u32[]', space=smem, size = 0x4, offset = 0x4, fixed_abs, tag = 'smem constant byte address 0x4 - core index']
  #allocation1 [shape = 'u32[144,128]{1,0:T(1,128)}', space=vmem, size = 0x12000, scoped, tag = 'internal scratch']
  #allocation2 [shape = 'f32[8,1]{1,0:T(8,128)}', space=vmem, size = 0x1000, scoped, tag = 'scratch operand']
  #allocation3 [shape = 'f32[8,1]{1,0:T(8,128)}', space=vmem, size = 0x1000, scoped, tag = 'scratch operand']
  #allocation4 [shape = 'f32[8,1]{1,0:T(8,128)}', space=vmem, size = 0x1000, scoped, tag = 'scratch operand']
  #allocation5 [shape = 'f32[8,1]{1,0:T(8,128)}', space=vmem, size = 0x1000, scoped, tag = 'scratch operand']
  #allocation6 [shape = 'f32[8,1]{1,0:T(8,128)}', space=vmem, size = 0x1000, scoped, tag = 'scratch operand']
  %s0 = inlined_call_operand.vmem [shape: f32[8,32], index: 0, kind: input, shape index: {}]
  %s1 = inlined_call_operand.vmem [shape: f32[32,8], index: 1, kind: input, shape index: {}]
  %s2 = inlined_call_operand.vmem [shape: f32[8,4], index: 2, kind: input, shape index: {}]
  %s3 = inlined_call_operand.vmem [shape: s32[8,1], index: 3, kind: input, shape index: {}]
  %s4 = inlined_call_operand.vmem [shape: s32[1,8], index: 4, kind: input, shape index: {}]
  %s5 = inlined_call_operand.vmem [shape: f32[8,1], index: 5, kind: input, shape index: {}]
  %s6 = inlined_call_operand.vmem [shape: f32[1,128], index: 6, kind: output, shape index: {}]
  %s7 = sld [smem:[#allocation0]]
  $region50: #{loss_fn.1} parent=0
    _
  %s9 = ssub.s32 1, %s7
  %s10 = scalar_select 0, %s9, %s7
  // Predicated region
  $region2: #{loss_fn.1} parent=0 // pred_check
    _
  $region3: #{loss_fn.1} parent=0 // pred_check_branch
    %12 = sbr.rel (0) target = $region5
  $region4: #{loss_fn.1} parent=0 // pred_region
    _
  $region5: #{loss_fn.1} parent=0 // pred_fallthru
    _
  // Predicated region
  $region6: #{loss_fn.1} parent=0 // pred_check
    _
  $region7: #{loss_fn.1} parent=0 // pred_check_branch
    %14 = sbr.rel (0) target = $region9
  $region8: #{loss_fn.1} parent=0 // pred_region
    _
  $region9: #{loss_fn.1} parent=0 // pred_fallthru
    _
  // Predicated region
  $region10: #{loss_fn.1} parent=0 // pred_check
    _
  $region11: #{loss_fn.1} parent=0 // pred_check_branch
    %16 = sbr.rel (0) target = $region13
  $region12: #{loss_fn.1} parent=0 // pred_region
    _
  $region13: #{loss_fn.1} parent=0 // pred_fallthru
    _
  // Predicated region
  $region14: #{loss_fn.1} parent=0 // pred_check
    _
  $region15: #{loss_fn.1} parent=0 // pred_check_branch
    %18 = sbr.rel (0) target = $region17
  $region16: #{loss_fn.1} parent=0 // pred_region
    _
  $region17: #{loss_fn.1} parent=0 // pred_fallthru
    _
  // Predicated region
  $region18: #{loss_fn.1} parent=0 // pred_check
    _
  $region19: #{loss_fn.1} parent=0 // pred_check_branch
    %20 = sbr.rel (0) target = $region21
  $region20: #{loss_fn.1} parent=0 // pred_region
    _
  $region21: #{loss_fn.1} parent=0 // pred_fallthru
    _
  // Predicated region
  $region22: #{loss_fn.1} parent=0 // pred_check
    _
  $region23: #{loss_fn.1} parent=0 // pred_check_branch
    %22 = sbr.rel (0) target = $region25
  $region24: #{loss_fn.1} parent=0 // pred_region
    _
  $region25: #{loss_fn.1} parent=0 // pred_fallthru
    _
  %p23 = scmp.eq.s32.totalorder 0, 0
  // Predicated region
  $region26: #{loss_fn.1} parent=0 // pred_check
    %p24 = pneg %p23
  $region27: #{loss_fn.1} parent=0 // pred_check_branch
    %26 = sbr.rel (%p24) target = $region29
  $region28: #{loss_fn.1} parent=0 // pred_region
    %vm27 = vcmask 7168
    %28 = vst.msk [vmem:[#allocation2] sm:$0xff] %vm27, -inf
    %29 = vst.msk [vmem:[#allocation5] sm:$0xff] %vm27, -inf
    %30 = vst.msk [vmem:[#allocation3] sm:$0xff] %vm27, 0.0
    %31 = vst.msk [vmem:[#allocation6] sm:$0xff] %vm27, 0.0
    %32 = vst.msk [vmem:[#allocation4] sm:$0xff] %vm27, 0.0
  $region29: #{loss_fn.1} parent=0 // pred_fallthru
    _
  %v33 = vld [vmem:[%s0] sm:$0xff]
  %v34 = vld [vmem:[%s1] sm:$0xff]
  %v35 = vld [vmem:[%s1 + $0x8] sm:$0xff]
  %v36 = vld [vmem:[%s1 + $0x10] sm:$0xff]
  %v37 = vld [vmem:[%s1 + $0x18] sm:$0xff]
  %vm38 = vcmask 261120
  %v40 = vsel %vm38, %v33, 0
  %42 = vmatprep.subr.mxu0 0.0
  %43 = vmatpush1.msra.mxu0 0.0
  %44 = vmatprep.subr.mxu0 0.0
  %45 = vmatpush1.msra.mxu0 0.0
  %46 = vmatprep.subr.mxu0 0.0
  %47 = vmatpush1.msra.mxu0 0.0
  %48 = vmatprep.subr.mxu0 0.0
  %49 = vmatpush1.msra.mxu0 0.0
  %50 = vmatprep.subr.mxu0 0.0
  %51 = vmatpush1.msra.mxu0 0.0
  %52 = vmatprep.subr.mxu0 0.0
  %53 = vmatpush1.msra.mxu0 0.0
  %54 = vmatprep.subr.mxu0 0.0
  %55 = vmatpush1.msra.mxu0 0.0
  %56 = vmatprep.subr.mxu0 0.0
  %57 = vmatpush1.msra.mxu0 0.0
  %58 = vmatprep.subr.mxu0 0.0
  %59 = vmatpush1.msra.mxu0 0.0
  %60 = vmatprep.subr.mxu0 0.0
  %61 = vmatpush1.msra.mxu0 0.0
  %62 = vmatprep.subr.mxu0 0.0
  %63 = vmatpush1.msra.mxu0 0.0
  %64 = vmatprep.subr.mxu0 0.0
  %65 = vmatpush1.msra.mxu0 0.0
  %66 = vmatprep.subr.mxu0 0.0
  %67 = vmatpush1.msra.mxu0 %v37
  %68 = vmatprep.subr.mxu0 0.0
  %69 = vmatpush1.msra.mxu0 %v36
  %70 = vmatprep.subr.mxu0 0.0
  %71 = vmatpush1.msra.mxu0 %v35
  %72 = vmatprep.subr.mxu0 0.0
  %73 = vmatpush1.msra.mxu0 %v34
  %74 = vmatprep.subr.mxu0 0.0
  %75 = vmatpush2.msra.mxu0 0.0
  %76 = vmatprep.subr.mxu0 0.0
  %77 = vmatpush2.msra.mxu0 0.0
  %78 = vmatprep.subr.mxu0 0.0
  %79 = vmatpush2.msra.mxu0 0.0
  %80 = vmatprep.subr.mxu0 0.0
  %81 = vmatpush2.msra.mxu0 0.0
  %82 = vmatprep.subr.mxu0 0.0
  %83 = vmatpush2.msra.mxu0 0.0
  %84 = vmatprep.subr.mxu0 0.0
  %85 = vmatpush2.msra.mxu0 0.0
  %86 = vmatprep.subr.mxu0 0.0
  %87 = vmatpush2.msra.mxu0 0.0
  %88 = vmatprep.subr.mxu0 0.0
  %89 = vmatpush2.msra.mxu0 0.0
  %90 = vmatprep.subr.mxu0 0.0
  %91 = vmatpush2.msra.mxu0 0.0
  %92 = vmatprep.subr.mxu0 0.0
  %93 = vmatpush2.msra.mxu0 0.0
  %94 = vmatprep.subr.mxu0 0.0
  %95 = vmatpush2.msra.mxu0 0.0
  %96 = vmatprep.subr.mxu0 0.0
  %97 = vmatpush2.msra.mxu0 0.0
  %98 = vmatprep.subr.mxu0 0.0
  %99 = vmatpush2.msra.mxu0 0.0
  %100 = vmatprep.subr.mxu0 0.0
  %101 = vmatpush2.msra.mxu0 0.0
  %102 = vmatprep.subr.mxu0 0.0
  %103 = vmatpush2.msra.mxu0 0.0
  %104 = vmatprep.subr.mxu0 0.0
  %105 = vmatpush2.msra.mxu0 0.0
  %106 = vmatprep.mubr.f32.mxu0 0.0
  %107 = vmatmul.mubr.f32.gmra.mxu0 %v40
  %v108 = vpop.f32.mrf.mxu0
  %v109 = vadd.f32 0.0, %v108
  %v110 = vpop.f32.mrf.mxu0
  %111 = vdwg.mxu0
  %v112 = vld [vmem:[%s3] sm:$0xff]
  %v113 = vld [vmem:[%s4] sm:$0x1]
  %114 = vset.pattern.permute.xlu0 0
  %115 = vperm.xlu0 %114, %v112
  %v116 = vpop.permute.xlu0 %115
  %v117 = vlaneseq
  %v118 = vshrl.u32 %v117, 7
  %v119 = vsub.s32 0, %v118
  %v120 = vrot.slane %v113, %v119
  %vm121 = vcmp.eq.s32.totalorder %v116, %v120
  %v122 = vsel %vm121, 1, 0
  %v123 = vcvt.s32.f32 %v122
  %v124 = vmul.f32 %v109, 20.0
  %v125 = vsel %vm121, 0.0, %v124
  %vm126 = vcmask 64512
  %v127 = vsel %vm126, %v125, -inf
  %128 = vmax.xlane.f32.xlu0 %v127
  %v129 = vpop.xlane.xlu0 %128
  %v130 = vld [vmem:[#allocation5] sm:$0xff]
  %v131 = vmax.f32 %v130, %v129
  %v132 = vld [vmem:[#allocation6] sm:$0xff]
  %v133 = vsub.f32 %v130, %v131
  %v134 = vmul.f32 %v133, 1.442695
  %v135 = vpow.pop %v134
  %v136 = vmul.f32 %v132, %v135
  %138 = vset.pattern.permute.xlu0 0
  %139 = vperm.xlu0 %138, %v131
  %v140 = vpop.permute.xlu0 %139
  %v142 = vsub.f32 %v125, %v140
  %v143 = vmul.f32 %v142, 1.442695
  %v144 = vpow.pop %v143
  %v145 = vsel %vm126, %v144, 0.0
  %146 = vadd.xlane.f32.xlu0 %v145
  %v147 = vpop.xlane.xlu0 %146
  %v148 = vadd.f32 %v136, %v147
  %vm149 = vcmask 7168
  %150 = vst.msk [vmem:[#allocation6] sm:$0xff] %vm149, %v148
  %151 = vst.msk [vmem:[#allocation5] sm:$0xff] %vm149, %v131
  %s152 = smul.u32 0, 8
  %s153 = smul.u32 0, 8
  %s154 = sadd.s32 %s153, 8
  %p155 = scmp.lt.s32.totalorder %s152, %s154
  %s156 = sadd.s32 %s152, 8
  %p157 = scmp.lt.s32.totalorder %s153, %s156
  %p158 = pnand %p155, %p157
  %p159 = pneg %p158
  // Predicated region
  $region30: #{loss_fn.1} parent=0 // pred_check
    _
  $region31: #{loss_fn.1} parent=0 // pred_check_branch
    %161 = sbr.rel (%p158) target = $region33
  $region32: #{loss_fn.1} parent=0 // pred_region
    %v162 = vlaneseq
    %v163 = vshrl.u32 %v162, 7
    %v164 = vstv %s152
    %v165 = vadd.s32 %v164, %v163
    %v166 = vlaneseq
    %v167 = vand.u32 %v166, 127
    %v168 = vstv %s153
    %v169 = vadd.s32 %v168, %v167
    %vm170 = vcmp.eq.s32.totalorder %v165, %v169
    %v171 = vmul.f32 %v109, 10.0
    %v172 = vsel %vm170, 0.0, %v171
    %v173 = vsel %vm170, 0.0, %v123
    %v174 = vsel %vm126, %v172, -inf
    %175 = vmax.xlane.f32.xlu0 %v174
    %v176 = vpop.xlane.xlu0 %175
    %v177 = vld [vmem:[#allocation2] sm:$0xff]
    %v178 = vmax.f32 %v177, %v176
    %v179 = vld [vmem:[#allocation3] sm:$0xff]
    %v180 = vsub.f32 %v177, %v178
    %v181 = vmul.f32 %v180, 1.442695
    %v182 = vpow.pop %v181
    %v183 = vmul.f32 %v179, %v182
    %185 = vset.pattern.permute.xlu0 0
    %186 = vperm.xlu0 %185, %v178
    %v187 = vpop.permute.xlu0 %186
    %v189 = vsub.f32 %v172, %v187
    %v190 = vmul.f32 %v189, 1.442695
    %v191 = vpow.pop %v190
    %v192 = vsel %vm126, %v191, 0.0
    %193 = vadd.xlane.f32.xlu0 %v192
    %v194 = vpop.xlane.xlu0 %193
    %v195 = vadd.f32 %v183, %v194
    %196 = vst.msk [vmem:[#allocation3] sm:$0xff] %vm149, %v195
    %197 = vst.msk [vmem:[#allocation2] sm:$0xff] %vm149, %v178
    %v198 = vld [vmem:[#allocation4] sm:$0xff]
    %v199 = vmul.f32 %v173, %v172
    %v200 = vsel %vm126, %v199, 0.0
    %201 = vadd.xlane.f32.xlu0 %v200
    %v202 = vpop.xlane.xlu0 %201
    %v203 = vadd.f32 %v198, %v202
    %204 = vst.msk [vmem:[#allocation4] sm:$0xff] %vm149, %v203
  $region33: #{loss_fn.1} parent=0 // pred_fallthru
    _
  %p205 = pneg %p159
  // Predicated region
  $region34: #{loss_fn.1} parent=0 // pred_check
    _
  $region35: #{loss_fn.1} parent=0 // pred_check_branch
    %207 = sbr.rel (%p159) target = $region37
  $region36: #{loss_fn.1} parent=0 // pred_region
    %v208 = vmul.f32 %v109, 10.0
    %v209 = vsel %vm126, %v208, -inf
    %210 = vmax.xlane.f32.xlu0 %v209
    %v211 = vpop.xlane.xlu0 %210
    %v212 = vld [vmem:[#allocation2] sm:$0xff]
    %v213 = vmax.f32 %v212, %v211
    %v214 = vld [vmem:[#allocation3] sm:$0xff]
    %v215 = vsub.f32 %v212, %v213
    %v216 = vmul.f32 %v215, 1.442695
    %v217 = vpow.pop %v216
    %v218 = vmul.f32 %v214, %v217
    %220 = vset.pattern.permute.xlu0 0
    %221 = vperm.xlu0 %220, %v213
    %v222 = vpop.permute.xlu0 %221
    %v224 = vsub.f32 %v208, %v222
    %v225 = vmul.f32 %v224, 1.442695
    %v226 = vpow.pop %v225
    %v227 = vsel %vm126, %v226, 0.0
    %228 = vadd.xlane.f32.xlu0 %v227
    %v229 = vpop.xlane.xlu0 %228
    %v230 = vadd.f32 %v218, %v229
    %231 = vst.msk [vmem:[#allocation3] sm:$0xff] %vm149, %v230
    %232 = vst.msk [vmem:[#allocation2] sm:$0xff] %vm149, %v213
    %v233 = vld [vmem:[#allocation4] sm:$0xff]
    %v234 = vmul.f32 %v123, %v208
    %v235 = vsel %vm126, %v234, 0.0
    %236 = vadd.xlane.f32.xlu0 %v235
    %v237 = vpop.xlane.xlu0 %236
    %v238 = vadd.f32 %v233, %v237
    %239 = vst.msk [vmem:[#allocation4] sm:$0xff] %vm149, %v238
  $region37: #{loss_fn.1} parent=0 // pred_fallthru
    _
  // Predicated region
  $region38: #{loss_fn.1} parent=0 // pred_check
    %p240 = pneg %p23
  $region39: #{loss_fn.1} parent=0 // pred_check_branch
    %242 = sbr.rel (%p240) target = $region41
  $region40: #{loss_fn.1} parent=0 // pred_region
    %v243 = vld [vmem:[%s5] sm:$0xff]
    %vm244 = vcmp.eq.f32.partialorder %v243, 0.0
    %v245 = vsel %vm244, 1.0, %v243
    %v246 = vld [vmem:[#allocation4] sm:$0xff]
    %v247 = vld [vmem:[#allocation2] sm:$0xff]
    %v248 = vld [vmem:[#allocation3] sm:$0xff]
    %v249 = vadd.f32 %v248, 1e-12
    %v250 = vlog2.pop %v249
    %v251 = vmul.f32 %v250, 0.6931472
    %v252 = vadd.f32 %v247, %v251
    %v253 = vmul.f32 %v243, %v252
    %v254 = vsub.f32 %v246, %v253
    %v255 = vrcp.pop %v245
    %v256 = vmul.f32 %v254, %v255
    %v257 = vsel %vm149, %v256, 0.0
    %258 = vadd.xlane.f32.xlu0 %v257
    %v259 = vpop.xlane.xlu0 %258
    %v260 = vrot.slane %v259, 4
    %v261 = vadd.f32 %v259, %v260
    %v262 = vrot.slane %v261, 2
    %v263 = vadd.f32 %v261, %v262
    %v264 = vrot.slane %v263, 1
    %v265 = vadd.f32 %v263, %v264
    %s266 = vtos %v265
    %v267 = vld [vmem:[%s2] sm:$0xff]
    %vm268 = vcmask 31744
    %v269 = vsel %vm268, %v267, -inf
    %270 = vmax.xlane.f32.xlu0 %v269
    %v271 = vpop.xlane.xlu0 %270
    %v272 = vsub.f32 %v267, %v271
    %v273 = vmul.f32 %v272, 1.442695
    %v274 = vpow.pop %v273
    %v275 = vsel %vm268, %v274, 0.0
    %276 = vadd.xlane.f32.xlu0 %v275
    %v277 = vpop.xlane.xlu0 %276
    %v278 = vlog2.pop %v277
    %v279 = vmul.f32 %v278, 0.6931472
    %v280 = vlaneseq
    %v281 = vand.u32 %v280, 127
    %vm282 = vcmp.eq.s32.totalorder %v116, %v281
    %v283 = vsel %vm282, 1, 0
    %v284 = vcvt.s32.f32 %v283
    %v285 = vsub.f32 %v272, %v279
    %v286 = vmul.f32 %v284, %v285
    %v287 = vsel %vm268, %v286, 0.0
    %288 = vadd.xlane.f32.xlu0 %v287
    %v289 = vpop.xlane.xlu0 %288
    %v290 = vrot.slane %v289, 4
    %v291 = vadd.f32 %v289, %v290
    %v292 = vrot.slane %v291, 2
    %v293 = vadd.f32 %v291, %v292
    %v294 = vrot.slane %v293, 1
    %v295 = vadd.f32 %v293, %v294
    %s296 = vtos %v295
    %s297 = ssub.f32 0.0, %s296
    %v298 = vld [vmem:[#allocation6] sm:$0xff]
    %v299 = vsel %vm149, %v298, 0.0
    %300 = vadd.xlane.f32.xlu0 %v299
    %v301 = vpop.xlane.xlu0 %300
    %v302 = vrot.slane %v301, 4
    %v303 = vadd.f32 %v301, %v302
    %v304 = vrot.slane %v303, 2
    %v305 = vadd.f32 %v303, %v304
    %v306 = vrot.slane %v305, 1
    %v307 = vadd.f32 %v305, %v306
    %s308 = vtos %v307
    %vm309 = vcmp.eq.s32.totalorder %v281, 0
    %v310 = vstv %s266
    %v311 = vsel %vm309, %v310, 0.0
    %vm312 = vcmp.eq.s32.totalorder %v281, 1
    %v313 = vstv %s297
    %v314 = vsel %vm312, %v313, 0.0
    %v315 = vadd.f32 %v311, %v314
    %vm316 = vcmp.eq.s32.totalorder %v281, 2
    %v317 = vstv %s308
    %v318 = vsel %vm316, %v317, 0.0
    %v319 = vadd.f32 %v315, %v318
    %320 = vst [vmem:[%s6] sm:$0x1] %v319
  $region41: #{loss_fn.1} parent=0 // pred_fallthru
    _
  // Predicated region
  $region42: #{loss_fn.1} parent=0 // pred_check
    _
  $region43: #{loss_fn.1} parent=0 // pred_check_branch
    %322 = sbr.rel (0) target = $region45
  $region44: #{loss_fn.1} parent=0 // pred_region
    _
  $region45: #{loss_fn.1} parent=0 // pred_fallthru
    _
  // Predicated region
  $region46: #{loss_fn.1} parent=0 // pred_check
    _
  $region47: #{loss_fn.1} parent=0 // pred_check_branch
    %324 = sbr.rel (0) target = $region49
  $region48: #{loss_fn.1} parent=0 // pred_region
    _
  $region49: #{loss_fn.1} parent=0 // pred_fallthru
    _

</llo_original>
